<compile_context>
chip_gen: v5e
topology: v5e:2x2
jax: 0.10.0
libtpu: 0.0.40
codegen_flags: <defaults>
</compile_context>

<pallas_src>
import functools

import jax
import jax.numpy as jnp
from jax.experimental import pallas as pl
from jax.experimental.pallas import tpu as pltpu


# --------------------------------------------------------------------------
# Kernels
# --------------------------------------------------------------------------
def _se1d_flat_kernel(x_ref, pool_ref, expand_ref, w1_ref, b1_ref, w2_ref,
                      b2_ref, o_ref):
    """Fused SE block on a lane-dense flattened tile.

    x_ref     : (bb, C*L)   input tile (channels-first flattening, lane-dense)
    pool_ref  : (C*L, C)    constant avg-pool matrix (1/L at [c*L+l, c])
    expand_ref: (C, C*L)    constant broadcast matrix (1 at [c, c*L+l])
    w1_ref    : (C, C//r)   fc1 weight, pre-transposed
    b1_ref    : (1, C//r)
    w2_ref    : (C//r, C)   fc2 weight, pre-transposed
    b2_ref    : (1, C)
    o_ref     : (bb, C*L)
    """
    xf = x_ref[...].astype(jnp.float32)
    # Adaptive avg pool(1) as a matmul -> (bb, C), accumulated in f32.
    y = jnp.dot(xf, pool_ref[...], preferred_element_type=jnp.float32)
    z = jnp.maximum(
        jnp.dot(y, w1_ref[...], preferred_element_type=jnp.float32) + b1_ref[...],
        0.0)
    s = jax.nn.sigmoid(
        jnp.dot(z, w2_ref[...], preferred_element_type=jnp.float32) + b2_ref[...])
    # Broadcast per-channel scale across each L-segment (stays lane-dense).
    s_full = jnp.dot(s, expand_ref[...], preferred_element_type=jnp.float32)
    o_ref[...] = (xf * s_full).astype(o_ref.dtype)


def _se1d_3d_kernel(x_ref, w1_ref, b1_ref, w2_ref, b2_ref, o_ref):
    """Fused SE block on a (bb, C, L) tile — used when L itself is lane-dense.

    x_ref : (bb, C, L)   input tile, channels-first (PyTorch layout)
    o_ref : (bb, C, L)
    """
    xf = x_ref[...].astype(jnp.float32)
    inv_len = 1.0 / xf.shape[-1]                      # static constant
    y = jnp.sum(xf, axis=-1) * inv_len                # (bb, C), f32 accumulation
    z = jnp.maximum(
        jnp.dot(y, w1_ref[...], preferred_element_type=jnp.float32) + b1_ref[...],
        0.0)
    s = jax.nn.sigmoid(
        jnp.dot(z, w2_ref[...], preferred_element_type=jnp.float32) + b2_ref[...])
    o_ref[...] = (xf * s[:, :, None]).astype(o_ref.dtype)


# --------------------------------------------------------------------------
# Tiling plan
# --------------------------------------------------------------------------
def _plan_batch_tiling(bsz, c, length, itemsize, *, align8,
                       budget_bytes=4 << 20):
    """Pick (batch_block, grid_steps, padded_batch).

    budget_bytes is the per-buffer x-tile budget; double-buffered in+out tiles
    then use <= 4 * budget_bytes of VMEM, which fits every generation
    (v5e/v6e 128 MiB, v7x 64 MiB) with plenty of headroom.
    """
    per_sample = max(1, c * length * itemsize)
    bb = max(1, budget_bytes // per_sample)
    bb = min(bb, bsz)
    if bsz >= 2:
        # Keep at least two grid steps so ("parallel",) shards the batch
        # across v7x's two TensorCores.
        bb = min(bb, pl.cdiv(bsz, 2))
    if align8 and bb < bsz and bb % 8:
        # Flattened path: batch is the sublane (second-to-last) block dim,
        # so keep it a multiple of 8 when the batch is actually tiled.
        bb = max(8, (bb // 8) * 8)
    steps = max(pl.cdiv(bsz, bb), 2 if bsz >= 2 else 1)
    return bb, steps, steps * bb


# --------------------------------------------------------------------------
# Wrapper
# --------------------------------------------------------------------------
@functools.partial(jax.jit, static_argnames=("batch_block",))
def se_layer_1d(x, fc1_w, fc1_b, fc2_w, fc2_b, *, batch_block=None):
    """x: (B, C, L); fc*_w / fc*_b in PyTorch nn.Linear layout (out, in) / (out,)."""
    bsz, c, length = x.shape
    bott, c_in = fc1_w.shape
    assert c_in == c and fc2_w.shape == (c, bott), (fc1_w.shape, fc2_w.shape)
    out_dtype = x.dtype
    itemsize = jnp.dtype(x.dtype).itemsize

    # Lane-dense flattened path for small L (demo L=16 would otherwise leave
    # 87% of the load/store lanes masked). Gate on the constant pool/broadcast
    # matrices staying small.
    helper_bytes = 2 * c * length * c * 4
    use_flat = (length < 128
                and helper_bytes <= (8 << 20)
                and c * length * itemsize <= (1 << 20))

    if batch_block is None:
        batch_block, steps, padded = _plan_batch_tiling(
            bsz, c, length, itemsize, align8=use_flat)
    else:
        steps = pl.cdiv(bsz, batch_block)
        padded = steps * batch_block

    xp = x if padded == bsz else jnp.pad(x, ((0, padded - bsz), (0, 0), (0, 0)))

    # Tiny weights: transpose/cast once under jit, kept resident in VMEM.
    w1_t = jnp.transpose(fc1_w).astype(jnp.float32)        # (C, C//r)
    w2_t = jnp.transpose(fc2_w).astype(jnp.float32)        # (C//r, C)
    b1 = fc1_b.reshape(1, bott).astype(jnp.float32)
    b2 = fc2_b.reshape(1, c).astype(jnp.float32)

    weight_bytes = 4 * (2 * c * bott + bott + c)
    extra_bytes = helper_bytes if use_flat else 0
    tile_bytes = batch_block * c * length * itemsize
    needed = 4 * tile_bytes + 2 * (weight_bytes + extra_bytes) + (2 << 20)
    vmem_limit = int(min(max(needed, 32 << 20), 48 << 20))

    cost = pl.CostEstimate(
        flops=int(4 * padded * c * bott + 2 * padded * c * length),
        transcendentals=int(padded * c),
        bytes_accessed=int(2 * padded * c * length * itemsize
                           + weight_bytes + extra_bytes),
    )
    cparams = pltpu.CompilerParams(
        dimension_semantics=("parallel",),      # batch shards across TCs on v7x
        vmem_limit_bytes=vmem_limit,
    )

    if use_flat:
        cl = c * length
        x2 = xp.reshape(padded, cl)             # contiguous, free reshape
        # expand[c, c*L + l] = 1 ; pool = expand.T / L
        expand = jnp.kron(jnp.eye(c, dtype=jnp.float32),
                          jnp.ones((1, length), jnp.float32))     # (C, C*L)
        pool = expand.T * (1.0 / length)                          # (C*L, C)

        out2 = pl.pallas_call(
            _se1d_flat_kernel,
            out_shape=jax.ShapeDtypeStruct((padded, cl), out_dtype),
            grid=(steps,),
            in_specs=[
                pl.BlockSpec((batch_block, cl), lambda i: (i, 0)),
                pl.BlockSpec((cl, c), lambda i: (0, 0)),
                pl.BlockSpec((c, cl), lambda i: (0, 0)),
                pl.BlockSpec((c, bott), lambda i: (0, 0)),
                pl.BlockSpec((1, bott), lambda i: (0, 0)),
                pl.BlockSpec((bott, c), lambda i: (0, 0)),
                pl.BlockSpec((1, c), lambda i: (0, 0)),
            ],
            out_specs=pl.BlockSpec((batch_block, cl), lambda i: (i, 0)),
            compiler_params=cparams,
            cost_estimate=cost,
        )(x2, pool, expand, w1_t, b1, w2_t, b2)
        out = out2.reshape(padded, c, length)
    else:
        out = pl.pallas_call(
            _se1d_3d_kernel,
            out_shape=jax.ShapeDtypeStruct((padded, c, length), out_dtype),
            grid=(steps,),
            in_specs=[
                pl.BlockSpec((batch_block, c, length), lambda i: (i, 0, 0)),
                pl.BlockSpec((c, bott), lambda i: (0, 0)),
                pl.BlockSpec((1, bott), lambda i: (0, 0)),
                pl.BlockSpec((bott, c), lambda i: (0, 0)),
                pl.BlockSpec((1, c), lambda i: (0, 0)),
            ],
            out_specs=pl.BlockSpec((batch_block, c, length), lambda i: (i, 0, 0)),
            compiler_params=cparams,
            cost_estimate=cost,
        )(xp, w1_t, b1, w2_t, b2)

    if padded != bsz:
        out = out[:bsz]
    return out


def se_layer_1d_reference(x, fc1_w, fc1_b, fc2_w, fc2_b):
    """Pure-JAX reference matching the PyTorch module."""
    y = jnp.mean(x, axis=-1)                              # (B, C)
    z = jnp.maximum(y @ fc1_w.T + fc1_b, 0.0)
    s = jax.nn.sigmoid(z @ fc2_w.T + fc2_b)
    return x * s[:, :, None]


# --------------------------------------------------------------------------
# Self-test
# --------------------------------------------------------------------------
if __name__ == "__main__":
    def run_case(B, C, L, r, key):
        kx, k1, k2, k3, k4 = jax.random.split(key, 5)
        bott = max(1, C // r)
        x = jax.random.normal(kx, (B, C, L), jnp.float32)
        fc1_w = (0.2 * jax.random.normal(k1, (bott, C))).astype(jnp.float32)
        fc1_b = (0.2 * jax.random.normal(k2, (bott,))).astype(jnp.float32)
        fc2_w = (0.2 * jax.random.normal(k3, (C, bott))).astype(jnp.float32)
        fc2_b = (0.2 * jax.random.normal(k4, (C,))).astype(jnp.float32)

        out = jax.block_until_ready(se_layer_1d(x, fc1_w, fc1_b, fc2_w, fc2_b))
        assert out.shape == (B, C, L), out.shape
        assert bool(jnp.all(jnp.isfinite(out)))
        ref = jax.block_until_ready(
            se_layer_1d_reference(x, fc1_w, fc1_b, fc2_w, fc2_b))
        assert jnp.allclose(out, ref, rtol=1e-3, atol=1e-3), (out, ref)

    key = jax.random.PRNGKey(0)
    k_small, k_big = jax.random.split(key)
    # Small L (= the module's typical use): lane-dense flattened path.
    run_case(2, 32, 16, 16, k_small)
    # L multiple of 128: 3-D path where L itself is lane-dense.
    run_case(4, 32, 128, 16, k_big)

    print("KERNEL_OK")
</pallas_src>

<mosaic_0001>
module attributes {stable_mosaic.version = 11 : i64} {
  func.func @_se1d_flat_kernel(%arg0: i32, %arg1: memref<8x512xf32, #tpu.memory_space<vmem>>, %arg2: memref<512x32xf32, #tpu.memory_space<vmem>>, %arg3: memref<32x512xf32, #tpu.memory_space<vmem>>, %arg4: memref<32x2xf32, #tpu.memory_space<vmem>>, %arg5: memref<1x2xf32, #tpu.memory_space<vmem>>, %arg6: memref<2x32xf32, #tpu.memory_space<vmem>>, %arg7: memref<1x32xf32, #tpu.memory_space<vmem>>, %arg8: memref<8x512xf32, #tpu.memory_space<vmem>>) attributes {dimension_semantics = [#tpu.dimension_semantics<parallel>], iteration_bounds = array<i64: 2>, scalar_prefetch = 0 : i64, scratch_operands = 0 : i64, tpu.core_type = #tpu.core_type<tc>, window_params = [{transform_indices = @transform_0, window_bounds = array<i64: 8, 512>}, {pipeline_mode = #tpu.pipeline_mode<synchronous>, transform_indices = @transform_1, window_bounds = array<i64: 512, 32>}, {pipeline_mode = #tpu.pipeline_mode<synchronous>, transform_indices = @transform_2, window_bounds = array<i64: 32, 512>}, {pipeline_mode = #tpu.pipeline_mode<synchronous>, transform_indices = @transform_3, window_bounds = array<i64: 32, 2>}, {pipeline_mode = #tpu.pipeline_mode<synchronous>, transform_indices = @transform_4, window_bounds = array<i64: 1, 2>}, {pipeline_mode = #tpu.pipeline_mode<synchronous>, transform_indices = @transform_5, window_bounds = array<i64: 2, 32>}, {pipeline_mode = #tpu.pipeline_mode<synchronous>, transform_indices = @transform_6, window_bounds = array<i64: 1, 32>}, {transform_indices = @transform_7, window_bounds = array<i64: 8, 512>}]} {
    %c0 = arith.constant 0 : index
    %c0_0 = arith.constant 0 : index
    %0 = vector.load %arg1[%c0, %c0_0] : memref<8x512xf32, #tpu.memory_space<vmem>>, vector<8x512xf32>
    %c0_1 = arith.constant 0 : index
    %c0_2 = arith.constant 0 : index
    %1 = vector.load %arg2[%c0_1, %c0_2] : memref<512x32xf32, #tpu.memory_space<vmem>>, vector<512x32xf32>
    %cst = arith.constant dense<0.000000e+00> : vector<8x32xf32>
    %2 = tpu.matmul %0, %1, %cst {dimension_numbers = #tpu.dot_dimension_numbers<[1], [0], [0], [1], [0, 0, 1, 1], [], []>} : vector<8x512xf32>, vector<512x32xf32>, vector<8x32xf32> -> vector<8x32xf32>
    %c0_3 = arith.constant 0 : index
    %c0_4 = arith.constant 0 : index
    %3 = vector.load %arg4[%c0_3, %c0_4] : memref<32x2xf32, #tpu.memory_space<vmem>>, vector<32x2xf32>
    %cst_5 = arith.constant dense<0.000000e+00> : vector<8x2xf32>
    %4 = tpu.matmul %2, %3, %cst_5 {dimension_numbers = #tpu.dot_dimension_numbers<[1], [0], [0], [1], [0, 0, 1, 1], [], []>} : vector<8x32xf32>, vector<32x2xf32>, vector<8x2xf32> -> vector<8x2xf32>
    %c0_6 = arith.constant 0 : index
    %c0_7 = arith.constant 0 : index
    %5 = vector.load %arg5[%c0_6, %c0_7] : memref<1x2xf32, #tpu.memory_space<vmem>>, vector<1x2xf32>
    %6 = vector.broadcast %5 : vector<1x2xf32> to vector<8x2xf32>
    %7 = arith.addf %4, %6 : vector<8x2xf32>
    %cst_8 = arith.constant 0.000000e+00 : f32
    %8 = vector.broadcast %cst_8 : f32 to vector<8x2xf32>
    %9 = arith.maximumf %7, %8 : vector<8x2xf32>
    %c0_9 = arith.constant 0 : index
    %c0_10 = arith.constant 0 : index
    %10 = vector.load %arg6[%c0_9, %c0_10] : memref<2x32xf32, #tpu.memory_space<vmem>>, vector<2x32xf32>
    %cst_11 = arith.constant dense<0.000000e+00> : vector<8x32xf32>
    %11 = tpu.matmul %9, %10, %cst_11 {dimension_numbers = #tpu.dot_dimension_numbers<[1], [0], [0], [1], [0, 0, 1, 1], [], []>} : vector<8x2xf32>, vector<2x32xf32>, vector<8x32xf32> -> vector<8x32xf32>
    %c0_12 = arith.constant 0 : index
    %c0_13 = arith.constant 0 : index
    %12 = vector.load %arg7[%c0_12, %c0_13] : memref<1x32xf32, #tpu.memory_space<vmem>>, vector<1x32xf32>
    %13 = vector.broadcast %12 : vector<1x32xf32> to vector<8x32xf32>
    %14 = arith.addf %11, %13 : vector<8x32xf32>
    %15 = arith.negf %14 : vector<8x32xf32>
    %16 = math.exp %15 : vector<8x32xf32>
    %cst_14 = arith.constant 1.000000e+00 : f32
    %17 = vector.broadcast %cst_14 : f32 to vector<8x32xf32>
    %18 = arith.addf %17, %16 : vector<8x32xf32>
    %19 = arith.divf %17, %18 : vector<8x32xf32>
    %c0_15 = arith.constant 0 : index
    %c0_16 = arith.constant 0 : index
    %20 = vector.load %arg3[%c0_15, %c0_16] : memref<32x512xf32, #tpu.memory_space<vmem>>, vector<32x512xf32>
    %cst_17 = arith.constant dense<0.000000e+00> : vector<8x512xf32>
    %21 = tpu.matmul %19, %20, %cst_17 {dimension_numbers = #tpu.dot_dimension_numbers<[1], [0], [0], [1], [0, 0, 1, 1], [], []>} : vector<8x32xf32>, vector<32x512xf32>, vector<8x512xf32> -> vector<8x512xf32>
    %22 = arith.mulf %0, %21 : vector<8x512xf32>
    %c0_18 = arith.constant 0 : index
    %c0_19 = arith.constant 0 : index
    %23 = vector.load %arg8[%c0_18, %c0_19] : memref<8x512xf32, #tpu.memory_space<vmem>>, vector<8x512xf32>
    tpu.vector_store %arg8[%c0_18, %c0_19], %22 {strides = array<i32>} : memref<8x512xf32, #tpu.memory_space<vmem>>, vector<8x512xf32>,
    return
  }
  func.func @transform_0(%arg0: i32) -> (i32, i32) {
    %c0_i32 = arith.constant 0 : i32
    %c0_i32_0 = arith.constant 0 : i32
    return %arg0, %c0_i32 : i32, i32
  }
  func.func @transform_1(%arg0: i32) -> (i32, i32) {
    %c0_i32 = arith.constant 0 : i32
    %c0_i32_0 = arith.constant 0 : i32
    %c0_i32_1 = arith.constant 0 : i32
    return %c0_i32, %c0_i32_0 : i32, i32
  }
  func.func @transform_2(%arg0: i32) -> (i32, i32) {
    %c0_i32 = arith.constant 0 : i32
    %c0_i32_0 = arith.constant 0 : i32
    %c0_i32_1 = arith.constant 0 : i32
    return %c0_i32, %c0_i32_0 : i32, i32
  }
  func.func @transform_3(%arg0: i32) -> (i32, i32) {
    %c0_i32 = arith.constant 0 : i32
    %c0_i32_0 = arith.constant 0 : i32
    %c0_i32_1 = arith.constant 0 : i32
    return %c0_i32, %c0_i32_0 : i32, i32
  }
  func.func @transform_4(%arg0: i32) -> (i32, i32) {
    %c0_i32 = arith.constant 0 : i32
    %c0_i32_0 = arith.constant 0 : i32
    %c0_i32_1 = arith.constant 0 : i32
    return %c0_i32, %c0_i32_0 : i32, i32
  }
  func.func @transform_5(%arg0: i32) -> (i32, i32) {
    %c0_i32 = arith.constant 0 : i32
    %c0_i32_0 = arith.constant 0 : i32
    %c0_i32_1 = arith.constant 0 : i32
    return %c0_i32, %c0_i32_0 : i32, i32
  }
  func.func @transform_6(%arg0: i32) -> (i32, i32) {
    %c0_i32 = arith.constant 0 : i32
    %c0_i32_0 = arith.constant 0 : i32
    %c0_i32_1 = arith.constant 0 : i32
    return %c0_i32, %c0_i32_0 : i32, i32
  }
  func.func @transform_7(%arg0: i32) -> (i32, i32) {
    %c0_i32 = arith.constant 0 : i32
    %c0_i32_0 = arith.constant 0 : i32
    return %arg0, %c0_i32 : i32, i32
  }
}

</mosaic_0001>

<llo_original>
// kernel: se_layer_1d.1
$region0: #{se_layer_1d.1}
  #allocation0 [shape = 'u32[]', space=smem, size = 0x4, offset = 0x4, fixed_abs, tag = 'smem constant byte address 0x4 - core index']
  #allocation1 [shape = 'u32[72,128]{1,0:T(1,128)}', space=vmem, size = 0x9000, scoped, tag = 'internal scratch']
  %s0 = inlined_call_operand.vmem [shape: f32[16,512], index: 0, kind: input, shape index: {}]
  %s1 = inlined_call_operand.vmem [shape: f32[512,32], index: 1, kind: input, shape index: {}]
  %s2 = inlined_call_operand.vmem [shape: f32[32,512], index: 2, kind: input, shape index: {}]
  %s3 = inlined_call_operand.vmem [shape: f32[32,2], index: 3, kind: input, shape index: {}]
  %s4 = inlined_call_operand.vmem [shape: f32[1,2], index: 4, kind: input, shape index: {}]
  %s5 = inlined_call_operand.vmem [shape: f32[2,32], index: 5, kind: input, shape index: {}]
  %s6 = inlined_call_operand.vmem [shape: f32[1,32], index: 6, kind: input, shape index: {}]
  %s7 = inlined_call_operand.vmem [shape: f32[16,512], index: 7, kind: output, shape index: {}]
  %s8 = sld [smem:[#allocation0]]
  $region61: #{se_layer_1d.1} parent=0
    _
  %s10 = ssub.s32 1, %s8
  %s11 = scalar_select 0, %s10, %s8
  loop: start=0, step=1, limit=4
  $region2: #{se_layer_1d.1} parent=0 // loop_pre_header
    _
  $region3: #{se_layer_1d.1} parent=0 // loop_header
    %s13 = sphi 0, %s17
    %p14 = scmp.ge.s32.totalorder %s13, 4
    %s23 = sphi 0, %s25
    %s26 = sphi 0, %s23
    %s27 = sphi 0, %s26
    %s43 = sphi 0, %s27
    %s47 = sphi 0, %s47
    %s49 = sphi 0, %s47
    %s50 = sphi 0, %s49
    %s64 = sphi 0, %s50
    %s68 = sphi 0, %s68
    %s70 = sphi 0, %s68
    %s71 = sphi 0, %s70
    %s85 = sphi 0, %s71
    %s89 = sphi 0, %s89
    %s91 = sphi 0, %s89
    %s92 = sphi 0, %s91
    %s106 = sphi 0, %s92
    %s110 = sphi 0, %s110
    %s112 = sphi 0, %s110
    %s113 = sphi 0, %s112
    %s127 = sphi 0, %s113
    %s131 = sphi 0, %s131
    %s133 = sphi 0, %s131
    %s134 = sphi 0, %s133
    %s148 = sphi 0, %s134
    %s152 = sphi 0, %s152
    %s154 = sphi 0, %s152
    %s155 = sphi 0, %s154
    %s169 = sphi 0, %s155
    %s175 = sphi 0, %s177
    %s178 = sphi 0, %s175
    %s179 = sphi 0, %s178
    %s195 = sphi 0, %s179
  $region4: #{se_layer_1d.1} parent=0 // loop_header_branch
    %16 = sbr.rel (%p14) target = $region8
  $region5: #{se_layer_1d.1} parent=0 // loop_body
    %s18 = ssub.s32 %s13, 1
    %s19 = ssub.s32 %s13, 2
    %s20 = sadd.s32 %s13, 1
    %s21 = ssub.s32 %s13, %s20
    %p22 = scmp.eq.s32.totalorder %s21, 0
    %s24 = sadd.s32 %s23, 1
    %s25 = scalar_select %p22, %s23, %s24
    %p28 = pneg %p22
    %p29 = scmp.eq.s32.totalorder %s13, 1
    %p30 = por %p28, %p29
    %p31 = scmp.ne.s32.totalorder %s23, %s26
    %p32 = scmp.eq.s32.totalorder %s13, 0
    %p33 = por %p31, %p32
    %p34 = scmp.ne.s32.totalorder %s23, %s26
    %p35 = scmp.eq.s32.totalorder %s18, 1
    %p36 = por %p34, %p35
    %p37 = scmp.ne.s32.totalorder %s26, %s27
    %p38 = scmp.eq.s32.totalorder %s18, 0
    %p39 = por %p37, %p38
    %p40 = scmp.ne.s32.totalorder %s26, %s27
    %p41 = scmp.eq.s32.totalorder %s19, 1
    %p42 = por %p40, %p41
    %p44 = scmp.ne.s32.totalorder %s27, %s43
    %p45 = scmp.eq.s32.totalorder %s19, 0
    %p46 = por %p44, %p45
    %s48 = sadd.s32 %s47, 1
    %p51 = scmp.eq.s32.totalorder %s13, 1
    %p52 = scmp.ne.s32.totalorder %s47, %s49
    %p53 = scmp.eq.s32.totalorder %s13, 0
    %p54 = por %p52, %p53
    %p55 = scmp.ne.s32.totalorder %s47, %s49
    %p56 = scmp.eq.s32.totalorder %s18, 1
    %p57 = por %p55, %p56
    %p58 = scmp.ne.s32.totalorder %s49, %s50
    %p59 = scmp.eq.s32.totalorder %s18, 0
    %p60 = por %p58, %p59
    %p61 = scmp.ne.s32.totalorder %s49, %s50
    %p62 = scmp.eq.s32.totalorder %s19, 1
    %p63 = por %p61, %p62
    %p65 = scmp.ne.s32.totalorder %s50, %s64
    %p66 = scmp.eq.s32.totalorder %s19, 0
    %p67 = por %p65, %p66
    %s69 = sadd.s32 %s68, 1
    %p72 = scmp.eq.s32.totalorder %s13, 1
    %p73 = scmp.ne.s32.totalorder %s68, %s70
    %p74 = scmp.eq.s32.totalorder %s13, 0
    %p75 = por %p73, %p74
    %p76 = scmp.ne.s32.totalorder %s68, %s70
    %p77 = scmp.eq.s32.totalorder %s18, 1
    %p78 = por %p76, %p77
    %p79 = scmp.ne.s32.totalorder %s70, %s71
    %p80 = scmp.eq.s32.totalorder %s18, 0
    %p81 = por %p79, %p80
    %p82 = scmp.ne.s32.totalorder %s70, %s71
    %p83 = scmp.eq.s32.totalorder %s19, 1
    %p84 = por %p82, %p83
    %p86 = scmp.ne.s32.totalorder %s71, %s85
    %p87 = scmp.eq.s32.totalorder %s19, 0
    %p88 = por %p86, %p87
    %s90 = sadd.s32 %s89, 1
    %p93 = scmp.eq.s32.totalorder %s13, 1
    %p94 = scmp.ne.s32.totalorder %s89, %s91
    %p95 = scmp.eq.s32.totalorder %s13, 0
    %p96 = por %p94, %p95
    %p97 = scmp.ne.s32.totalorder %s89, %s91
    %p98 = scmp.eq.s32.totalorder %s18, 1
    %p99 = por %p97, %p98
    %p100 = scmp.ne.s32.totalorder %s91, %s92
    %p101 = scmp.eq.s32.totalorder %s18, 0
    %p102 = por %p100, %p101
    %p103 = scmp.ne.s32.totalorder %s91, %s92
    %p104 = scmp.eq.s32.totalorder %s19, 1
    %p105 = por %p103, %p104
    %p107 = scmp.ne.s32.totalorder %s92, %s106
    %p108 = scmp.eq.s32.totalorder %s19, 0
    %p109 = por %p107, %p108
    %s111 = sadd.s32 %s110, 1
    %p114 = scmp.eq.s32.totalorder %s13, 1
    %p115 = scmp.ne.s32.totalorder %s110, %s112
    %p116 = scmp.eq.s32.totalorder %s13, 0
    %p117 = por %p115, %p116
    %p118 = scmp.ne.s32.totalorder %s110, %s112
    %p119 = scmp.eq.s32.totalorder %s18, 1
    %p120 = por %p118, %p119
    %p121 = scmp.ne.s32.totalorder %s112, %s113
    %p122 = scmp.eq.s32.totalorder %s18, 0
    %p123 = por %p121, %p122
    %p124 = scmp.ne.s32.totalorder %s112, %s113
    %p125 = scmp.eq.s32.totalorder %s19, 1
    %p126 = por %p124, %p125
    %p128 = scmp.ne.s32.totalorder %s113, %s127
    %p129 = scmp.eq.s32.totalorder %s19, 0
    %p130 = por %p128, %p129
    %s132 = sadd.s32 %s131, 1
    %p135 = scmp.eq.s32.totalorder %s13, 1
    %p136 = scmp.ne.s32.totalorder %s131, %s133
    %p137 = scmp.eq.s32.totalorder %s13, 0
    %p138 = por %p136, %p137
    %p139 = scmp.ne.s32.totalorder %s131, %s133
    %p140 = scmp.eq.s32.totalorder %s18, 1
    %p141 = por %p139, %p140
    %p142 = scmp.ne.s32.totalorder %s133, %s134
    %p143 = scmp.eq.s32.totalorder %s18, 0
    %p144 = por %p142, %p143
    %p145 = scmp.ne.s32.totalorder %s133, %s134
    %p146 = scmp.eq.s32.totalorder %s19, 1
    %p147 = por %p145, %p146
    %p149 = scmp.ne.s32.totalorder %s134, %s148
    %p150 = scmp.eq.s32.totalorder %s19, 0
    %p151 = por %p149, %p150
    %s153 = sadd.s32 %s152, 1
    %p156 = scmp.eq.s32.totalorder %s13, 1
    %p157 = scmp.ne.s32.totalorder %s152, %s154
    %p158 = scmp.eq.s32.totalorder %s13, 0
    %p159 = por %p157, %p158
    %p160 = scmp.ne.s32.totalorder %s152, %s154
    %p161 = scmp.eq.s32.totalorder %s18, 1
    %p162 = por %p160, %p161
    %p163 = scmp.ne.s32.totalorder %s154, %s155
    %p164 = scmp.eq.s32.totalorder %s18, 0
    %p165 = por %p163, %p164
    %p166 = scmp.ne.s32.totalorder %s154, %s155
    %p167 = scmp.eq.s32.totalorder %s19, 1
    %p168 = por %p166, %p167
    %p170 = scmp.ne.s32.totalorder %s155, %s169
    %p171 = scmp.eq.s32.totalorder %s19, 0
    %p172 = por %p170, %p171
    %s173 = ssub.s32 %s13, %s20
    %p174 = scmp.eq.s32.totalorder %s173, 0
    %s176 = sadd.s32 %s175, 1
    %s177 = scalar_select %p174, %s175, %s176
    %p180 = pneg %p174
    %p181 = scmp.eq.s32.totalorder %s13, 1
    %p182 = por %p180, %p181
    %p183 = scmp.ne.s32.totalorder %s175, %s178
    %p184 = scmp.eq.s32.totalorder %s13, 0
    %p185 = por %p183, %p184
    %p186 = scmp.ne.s32.totalorder %s175, %s178
    %p187 = scmp.eq.s32.totalorder %s18, 1
    %p188 = por %p186, %p187
    %p189 = scmp.ne.s32.totalorder %s178, %s179
    %p190 = scmp.eq.s32.totalorder %s18, 0
    %p191 = por %p189, %p190
    %p192 = scmp.ne.s32.totalorder %s178, %s179
    %p193 = scmp.eq.s32.totalorder %s19, 1
    %p194 = por %p192, %p193
    %p196 = scmp.ne.s32.totalorder %s179, %s195
    %p197 = scmp.eq.s32.totalorder %s19, 0
    %p198 = por %p196, %p197
    %p199 = scmp.le.s32.totalorder 1, %s13
    %p200 = scmp.lt.s32.totalorder %s13, 3
    %p201 = pnand %p199, %p200
    %p202 = pneg %p201
    // Predicated region
    $region9: #{se_layer_1d.1} parent=5 // pred_check
      _
    $region10: #{se_layer_1d.1} parent=5 // pred_check_branch
      %204 = sbr.rel (%p201) target = $region12
    $region11: #{se_layer_1d.1} parent=5 // pred_region
      %s205 = ssub.s32 %s13, 1
      // Predicated region
      $region13: #{se_layer_1d.1} parent=11 // pred_check
        %p206 = pneg %p60
      $region14: #{se_layer_1d.1} parent=11 // pred_check_branch
        %208 = sbr.rel (%p206) target = $region16
      $region15: #{se_layer_1d.1} parent=11 // pred_region
        _
      $region16: #{se_layer_1d.1} parent=11 // pred_fallthru
        _
      // Predicated region
      $region17: #{se_layer_1d.1} parent=11 // pred_check
        %p209 = pneg %p81
      $region18: #{se_layer_1d.1} parent=11 // pred_check_branch
        %211 = sbr.rel (%p209) target = $region20
      $region19: #{se_layer_1d.1} parent=11 // pred_region
        _
      $region20: #{se_layer_1d.1} parent=11 // pred_fallthru
        _
      // Predicated region
      $region21: #{se_layer_1d.1} parent=11 // pred_check
        %p212 = pneg %p102
      $region22: #{se_layer_1d.1} parent=11 // pred_check_branch
        %214 = sbr.rel (%p212) target = $region24
      $region23: #{se_layer_1d.1} parent=11 // pred_region
        _
      $region24: #{se_layer_1d.1} parent=11 // pred_fallthru
        _
      // Predicated region
      $region25: #{se_layer_1d.1} parent=11 // pred_check
        %p215 = pneg %p123
      $region26: #{se_layer_1d.1} parent=11 // pred_check_branch
        %217 = sbr.rel (%p215) target = $region28
      $region27: #{se_layer_1d.1} parent=11 // pred_region
        _
      $region28: #{se_layer_1d.1} parent=11 // pred_fallthru
        _
      // Predicated region
      $region29: #{se_layer_1d.1} parent=11 // pred_check
        %p218 = pneg %p144
      $region30: #{se_layer_1d.1} parent=11 // pred_check_branch
        %220 = sbr.rel (%p218) target = $region32
      $region31: #{se_layer_1d.1} parent=11 // pred_region
        _
      $region32: #{se_layer_1d.1} parent=11 // pred_fallthru
        _
      // Predicated region
      $region33: #{se_layer_1d.1} parent=11 // pred_check
        %p221 = pneg %p165
      $region34: #{se_layer_1d.1} parent=11 // pred_check_branch
        %223 = sbr.rel (%p221) target = $region36
      $region35: #{se_layer_1d.1} parent=11 // pred_region
        _
      $region36: #{se_layer_1d.1} parent=11 // pred_fallthru
        _
    $region12: #{se_layer_1d.1} parent=5 // pred_fallthru
      _
    %p224 = scmp.lt.s32.totalorder %s13, 2
    // Predicated region
    $region37: #{se_layer_1d.1} parent=5 // pred_check
      %p225 = pneg %p224
    $region38: #{se_layer_1d.1} parent=5 // pred_check_branch
      %227 = sbr.rel (%p225) target = $region40
    $region39: #{se_layer_1d.1} parent=5 // pred_region
      // Predicated region
      $region41: #{se_layer_1d.1} parent=39 // pred_check
        %p228 = pneg %p33
      $region42: #{se_layer_1d.1} parent=39 // pred_check_branch
        %230 = sbr.rel (%p228) target = $region44
      $region43: #{se_layer_1d.1} parent=39 // pred_region
        %p231 = scmp.lt.s32.totalorder %s13, 1
        %s232 = scalar_select %p231, %s13, 1
        %s233 = smul.addr %s232, 4
        %s234 = smul.addr %s233, 8
        %s235 = scalar_lea.vmem %s0, %s234
      $region44: #{se_layer_1d.1} parent=39 // pred_fallthru
        _
    $region40: #{se_layer_1d.1} parent=5 // pred_fallthru
      _
    %p236 = scmp.le.s32.totalorder 1, %s13
    %p237 = scmp.lt.s32.totalorder %s13, 3
    %p238 = pnand %p236, %p237
    %p239 = pneg %p238
    // Predicated region
    $region45: #{se_layer_1d.1} parent=5 // pred_check
      _
    $region46: #{se_layer_1d.1} parent=5 // pred_check_branch
      %241 = sbr.rel (%p238) target = $region48
    $region47: #{se_layer_1d.1} parent=5 // pred_region
      %s242 = ssub.s32 %s13, 1
      %p243 = scmp.lt.s32.totalorder %s18, 1
      %s244 = scalar_select %p243, %s18, 1
      %s245 = smul.addr %s244, 4
      %s246 = smul.addr %s245, 8
      %s247 = scalar_lea.vmem %s0, %s246
      %p248 = pneg %p39
      %p249 = pneg %p36
      %p250 = pneg %p60
      %p251 = pneg %p57
      %p252 = pneg %p81
      %p253 = pneg %p78
      %p254 = pneg %p102
      %p255 = pneg %p99
      %p256 = pneg %p123
      %p257 = pneg %p120
      %p258 = pneg %p144
      %p259 = pneg %p141
      %p260 = pneg %p165
      %p261 = pneg %p162
      %p262 = pneg %p191
      %p263 = pneg %p188
      %p264 = scmp.lt.s32.totalorder %s18, 1
      %s265 = scalar_select %p264, %s18, 1
      %s266 = smul.addr %s265, 4
      %s267 = smul.addr %s266, 8
      %s268 = scalar_lea.vmem %s7, %s267
      %p269 = scmp.lt.s32.totalorder %s18, 1
      %s270 = scalar_select %p269, %s18, 1
      %s271 = smul.addr %s270, 4
      %s272 = smul.addr %s271, 8
      %s273 = scalar_lea.vmem %s0, %s272
      %p274 = scmp.lt.s32.totalorder %s18, 1
      %s275 = scalar_select %p274, %s18, 1
      %s276 = smul.addr %s275, 4
      %s277 = smul.addr %s276, 8
      %s278 = scalar_lea.vmem %s7, %s277
      %v279 = vld [vmem:[%s273] sm:$0xff]
      %v280 = vld [vmem:[%s273 + $0x8] sm:$0xff]
      %v281 = vld [vmem:[%s273 + $0x10] sm:$0xff]
      %v282 = vld [vmem:[%s273 + $0x18] sm:$0xff]
      %v283 = vld [vmem:[%s1] sm:$0xff]
      %v284 = vld [vmem:[%s1 + $0x8] sm:$0xff]
      %v285 = vld [vmem:[%s1 + $0x10] sm:$0xff]
      %v286 = vld [vmem:[%s1 + $0x18] sm:$0xff]
      %v287 = vld [vmem:[%s1 + $0x20] sm:$0xff]
      %v288 = vld [vmem:[%s1 + $0x28] sm:$0xff]
      %v289 = vld [vmem:[%s1 + $0x30] sm:$0xff]
      %v290 = vld [vmem:[%s1 + $0x38] sm:$0xff]
      %v291 = vld [vmem:[%s1 + $0x40] sm:$0xff]
      %v292 = vld [vmem:[%s1 + $0x48] sm:$0xff]
      %v293 = vld [vmem:[%s1 + $0x50] sm:$0xff]
      %v294 = vld [vmem:[%s1 + $0x58] sm:$0xff]
      %v295 = vld [vmem:[%s1 + $0x60] sm:$0xff]
      %v296 = vld [vmem:[%s1 + $0x68] sm:$0xff]
      %v297 = vld [vmem:[%s1 + $0x70] sm:$0xff]
      %v298 = vld [vmem:[%s1 + $0x78] sm:$0xff]
      %v299 = vld [vmem:[%s1 + $0x80] sm:$0xff]
      %v300 = vld [vmem:[%s1 + $0x88] sm:$0xff]
      %v301 = vld [vmem:[%s1 + $0x90] sm:$0xff]
      %v302 = vld [vmem:[%s1 + $0x98] sm:$0xff]
      %v303 = vld [vmem:[%s1 + $0xa0] sm:$0xff]
      %v304 = vld [vmem:[%s1 + $0xa8] sm:$0xff]
      %v305 = vld [vmem:[%s1 + $0xb0] sm:$0xff]
      %v306 = vld [vmem:[%s1 + $0xb8] sm:$0xff]
      %v307 = vld [vmem:[%s1 + $0xc0] sm:$0xff]
      %v308 = vld [vmem:[%s1 + $0xc8] sm:$0xff]
      %v309 = vld [vmem:[%s1 + $0xd0] sm:$0xff]
      %v310 = vld [vmem:[%s1 + $0xd8] sm:$0xff]
      %v311 = vld [vmem:[%s1 + $0xe0] sm:$0xff]
      %v312 = vld [vmem:[%s1 + $0xe8] sm:$0xff]
      %v313 = vld [vmem:[%s1 + $0xf0] sm:$0xff]
      %v314 = vld [vmem:[%s1 + $0xf8] sm:$0xff]
      %v315 = vld [vmem:[%s1 + $0x100] sm:$0xff]
      %v316 = vld [vmem:[%s1 + $0x108] sm:$0xff]
      %v317 = vld [vmem:[%s1 + $0x110] sm:$0xff]
      %v318 = vld [vmem:[%s1 + $0x118] sm:$0xff]
      %v319 = vld [vmem:[%s1 + $0x120] sm:$0xff]
      %v320 = vld [vmem:[%s1 + $0x128] sm:$0xff]
      %v321 = vld [vmem:[%s1 + $0x130] sm:$0xff]
      %v322 = vld [vmem:[%s1 + $0x138] sm:$0xff]
      %v323 = vld [vmem:[%s1 + $0x140] sm:$0xff]
      %v324 = vld [vmem:[%s1 + $0x148] sm:$0xff]
      %v325 = vld [vmem:[%s1 + $0x150] sm:$0xff]
      %v326 = vld [vmem:[%s1 + $0x158] sm:$0xff]
      %v327 = vld [vmem:[%s1 + $0x160] sm:$0xff]
      %v328 = vld [vmem:[%s1 + $0x168] sm:$0xff]
      %v329 = vld [vmem:[%s1 + $0x170] sm:$0xff]
      %v330 = vld [vmem:[%s1 + $0x178] sm:$0xff]
      %v331 = vld [vmem:[%s1 + $0x180] sm:$0xff]
      %v332 = vld [vmem:[%s1 + $0x188] sm:$0xff]
      %v333 = vld [vmem:[%s1 + $0x190] sm:$0xff]
      %v334 = vld [vmem:[%s1 + $0x198] sm:$0xff]
      %v335 = vld [vmem:[%s1 + $0x1a0] sm:$0xff]
      %v336 = vld [vmem:[%s1 + $0x1a8] sm:$0xff]
      %v337 = vld [vmem:[%s1 + $0x1b0] sm:$0xff]
      %v338 = vld [vmem:[%s1 + $0x1b8] sm:$0xff]
      %v339 = vld [vmem:[%s1 + $0x1c0] sm:$0xff]
      %v340 = vld [vmem:[%s1 + $0x1c8] sm:$0xff]
      %v341 = vld [vmem:[%s1 + $0x1d0] sm:$0xff]
      %v342 = vld [vmem:[%s1 + $0x1d8] sm:$0xff]
      %v343 = vld [vmem:[%s1 + $0x1e0] sm:$0xff]
      %v344 = vld [vmem:[%s1 + $0x1e8] sm:$0xff]
      %v345 = vld [vmem:[%s1 + $0x1f0] sm:$0xff]
      %v346 = vld [vmem:[%s1 + $0x1f8] sm:$0xff]
      %347 = vmatpush.msra.mxu0 %v298
      %348 = vmatpush.msra.mxu0 %v297
      %349 = vmatpush.msra.mxu0 %v296
      %350 = vmatpush.msra.mxu0 %v295
      %351 = vmatpush.msra.mxu0 %v294
      %352 = vmatpush.msra.mxu0 %v293
      %353 = vmatpush.msra.mxu0 %v292
      %354 = vmatpush.msra.mxu0 %v291
      %355 = vmatpush.msra.mxu0 %v290
      %356 = vmatpush.msra.mxu0 %v289
      %357 = vmatpush.msra.mxu0 %v288
      %358 = vmatpush.msra.mxu0 %v287
      %359 = vmatpush.msra.mxu0 %v286
      %360 = vmatpush.msra.mxu0 %v285
      %361 = vmatpush.msra.mxu0 %v284
      %362 = vmatpush.msra.mxu0 %v283
      %363 = vmatmul.f32.gmra.mxu0 %v279
      %v364 = vpop.f32.mrf.mxu0
      %v365 = vadd.f32 0.0, %v364
      %366 = vdwg.mxu0
      %367 = vmatpush.msra.mxu0 %v314
      %368 = vmatpush.msra.mxu0 %v313
      %369 = vmatpush.msra.mxu0 %v312
      %370 = vmatpush.msra.mxu0 %v311
      %371 = vmatpush.msra.mxu0 %v310
      %372 = vmatpush.msra.mxu0 %v309
      %373 = vmatpush.msra.mxu0 %v308
      %374 = vmatpush.msra.mxu0 %v307
      %375 = vmatpush.msra.mxu0 %v306
      %376 = vmatpush.msra.mxu0 %v305
      %377 = vmatpush.msra.mxu0 %v304
      %378 = vmatpush.msra.mxu0 %v303
      %379 = vmatpush.msra.mxu0 %v302
      %380 = vmatpush.msra.mxu0 %v301
      %381 = vmatpush.msra.mxu0 %v300
      %382 = vmatpush.msra.mxu0 %v299
      %383 = vmatmul.f32.gmra.mxu0 %v280
      %v384 = vpop.f32.mrf.mxu0
      %v385 = vadd.f32 %v365, %v384
      %386 = vdwg.mxu0
      %387 = vmatpush.msra.mxu0 %v330
      %388 = vmatpush.msra.mxu0 %v329
      %389 = vmatpush.msra.mxu0 %v328
      %390 = vmatpush.msra.mxu0 %v327
      %391 = vmatpush.msra.mxu0 %v326
      %392 = vmatpush.msra.mxu0 %v325
      %393 = vmatpush.msra.mxu0 %v324
      %394 = vmatpush.msra.mxu0 %v323
      %395 = vmatpush.msra.mxu0 %v322
      %396 = vmatpush.msra.mxu0 %v321
      %397 = vmatpush.msra.mxu0 %v320
      %398 = vmatpush.msra.mxu0 %v319
      %399 = vmatpush.msra.mxu0 %v318
      %400 = vmatpush.msra.mxu0 %v317
      %401 = vmatpush.msra.mxu0 %v316
      %402 = vmatpush.msra.mxu0 %v315
      %403 = vmatmul.f32.gmra.mxu0 %v281
      %v404 = vpop.f32.mrf.mxu0
      %v405 = vadd.f32 %v385, %v404
      %406 = vdwg.mxu0
      %407 = vmatpush.msra.mxu0 %v346
      %408 = vmatpush.msra.mxu0 %v345
      %409 = vmatpush.msra.mxu0 %v344
      %410 = vmatpush.msra.mxu0 %v343
      %411 = vmatpush.msra.mxu0 %v342
      %412 = vmatpush.msra.mxu0 %v341
      %413 = vmatpush.msra.mxu0 %v340
      %414 = vmatpush.msra.mxu0 %v339
      %415 = vmatpush.msra.mxu0 %v338
      %416 = vmatpush.msra.mxu0 %v337
      %417 = vmatpush.msra.mxu0 %v336
      %418 = vmatpush.msra.mxu0 %v335
      %419 = vmatpush.msra.mxu0 %v334
      %420 = vmatpush.msra.mxu0 %v333
      %421 = vmatpush.msra.mxu0 %v332
      %422 = vmatpush.msra.mxu0 %v331
      %423 = vmatmul.f32.gmra.mxu0 %v282
      %v424 = vpop.f32.mrf.mxu0
      %v425 = vadd.f32 %v405, %v424
      %426 = vdwg.mxu0
      %v427 = vld [vmem:[%s3] sm:$0xff]
      %v428 = vld [vmem:[%s3 + $0x8] sm:$0xff]
      %v429 = vld [vmem:[%s3 + $0x10] sm:$0xff]
      %v430 = vld [vmem:[%s3 + $0x18] sm:$0xff]
      %v431 = vld [vmem:[%s4] sm:$0x1]
      %v433 = vperm.slane %v431, 0
      %vm435 = vcmask 261120
      %v437 = vsel %vm435, %v425, 0
      %439 = vmatpush.msra.mxu0 0.0
      %440 = vmatpush.msra.mxu0 0.0
      %441 = vmatpush.msra.mxu0 0.0
      %442 = vmatpush.msra.mxu0 0.0
      %443 = vmatpush.msra.mxu0 0.0
      %444 = vmatpush.msra.mxu0 0.0
      %445 = vmatpush.msra.mxu0 0.0
      %446 = vmatpush.msra.mxu0 0.0
      %447 = vmatpush.msra.mxu0 0.0
      %448 = vmatpush.msra.mxu0 0.0
      %449 = vmatpush.msra.mxu0 0.0
      %450 = vmatpush.msra.mxu0 0.0
      %451 = vmatpush.msra.mxu0 %v430
      %452 = vmatpush.msra.mxu0 %v429
      %453 = vmatpush.msra.mxu0 %v428
      %454 = vmatpush.msra.mxu0 %v427
      %455 = vmatmul.f32.gmra.mxu0 %v437
      %v456 = vpop.f32.mrf.mxu0
      %v457 = vadd.f32 %v433, %v456
      %458 = vdwg.mxu0
      %v459 = vmax.f32 %v457, 0.0
      %v460 = vld [vmem:[%s5] sm:$0x3]
      %v461 = vld [vmem:[%s6] sm:$0x1]
      %v463 = vperm.slane %v461, 0
      %vm465 = vcmask 15360
      %v467 = vsel %vm465, %v459, 0
      %vm469 = vcmask 1041408
      %v471 = vsel %vm469, %v460, 0
      %473 = vmatpush.msra.mxu0 0.0
      %474 = vmatpush.msra.mxu0 0.0
      %475 = vmatpush.msra.mxu0 0.0
      %476 = vmatpush.msra.mxu0 0.0
      %477 = vmatpush.msra.mxu0 0.0
      %478 = vmatpush.msra.mxu0 0.0
      %479 = vmatpush.msra.mxu0 0.0
      %480 = vmatpush.msra.mxu0 0.0
      %481 = vmatpush.msra.mxu0 0.0
      %482 = vmatpush.msra.mxu0 0.0
      %483 = vmatpush.msra.mxu0 0.0
      %484 = vmatpush.msra.mxu0 0.0
      %485 = vmatpush.msra.mxu0 0.0
      %486 = vmatpush.msra.mxu0 0.0
      %487 = vmatpush.msra.mxu0 0.0
      %488 = vmatpush.msra.mxu0 %v471
      %489 = vmatmul.f32.gmra.mxu0 %v467
      %v490 = vpop.f32.mrf.mxu0
      %v491 = vadd.f32 %v463, %v490
      %492 = vdwg.mxu0
      %v493 = vxor.u32 %v491, 2147483648
      %v494 = vmul.f32 %v493, 1.442695
      %v495 = vpow.pop %v494
      %v496 = vadd.f32 %v495, 1.0
      %v497 = vrcp.pop %v496
      %v498 = vmul.f32 %v496, %v497
      %v499 = vsub.f32 1.0, %v498
      %v500 = vmul.f32 %v497, %v499
      %v501 = vadd.f32 %v497, %v500
      %vm502 = vweird.f32 %v496
      %vm503 = vweird.f32 %v497
      %vm504 = vmor %vm502, %vm503
      %v505 = vsel %vm504, %v497, %v501
      %v506 = vand.u32 2147483647, %v496
      %vm507 = vcmp.eq.f32.partialorder %v506, 8.507059e+37
      %v508 = vand.u32 %v496, 2147483648
      %v509 = vor.u32 1.1754944e-38, %v508
      %v510 = vsel %vm507, %v509, %v505
      %v511 = vmul.f32 1.0, %v510
      %v512 = vld [vmem:[%s2] sm:$0xff]
      %v513 = vld [vmem:[%s2 + $0x8] sm:$0xff]
      %v514 = vld [vmem:[%s2 + $0x10] sm:$0xff]
      %v515 = vld [vmem:[%s2 + $0x18] sm:$0xff]
      %v516 = vld [vmem:[%s2 + $0x20] sm:$0xff]
      %v517 = vld [vmem:[%s2 + $0x28] sm:$0xff]
      %v518 = vld [vmem:[%s2 + $0x30] sm:$0xff]
      %v519 = vld [vmem:[%s2 + $0x38] sm:$0xff]
      %v520 = vld [vmem:[%s2 + $0x40] sm:$0xff]
      %v521 = vld [vmem:[%s2 + $0x48] sm:$0xff]
      %v522 = vld [vmem:[%s2 + $0x50] sm:$0xff]
      %v523 = vld [vmem:[%s2 + $0x58] sm:$0xff]
      %v524 = vld [vmem:[%s2 + $0x60] sm:$0xff]
      %v525 = vld [vmem:[%s2 + $0x68] sm:$0xff]
      %v526 = vld [vmem:[%s2 + $0x70] sm:$0xff]
      %v527 = vld [vmem:[%s2 + $0x78] sm:$0xff]
      %v529 = vsel %vm435, %v511, 0
      %531 = vmatpush.msra.mxu0 0.0
      %532 = vmatpush.msra.mxu0 0.0
      %533 = vmatpush.msra.mxu0 0.0
      %534 = vmatpush.msra.mxu0 0.0
      %535 = vmatpush.msra.mxu0 0.0
      %536 = vmatpush.msra.mxu0 0.0
      %537 = vmatpush.msra.mxu0 0.0
      %538 = vmatpush.msra.mxu0 0.0
      %539 = vmatpush.msra.mxu0 0.0
      %540 = vmatpush.msra.mxu0 0.0
      %541 = vmatpush.msra.mxu0 0.0
      %542 = vmatpush.msra.mxu0 0.0
      %543 = vmatpush.msra.mxu0 %v524
      %544 = vmatpush.msra.mxu0 %v520
      %545 = vmatpush.msra.mxu0 %v516
      %546 = vmatpush.msra.mxu0 %v512
      %547 = vmatmul.f32.gmra.mxu0 %v529
      %v548 = vpop.f32.mrf.mxu0
      %v549 = vadd.f32 0.0, %v548
      %550 = vdwg.mxu0
      %551 = vmatpush.msra.mxu0 0.0
      %552 = vmatpush.msra.mxu0 0.0
      %553 = vmatpush.msra.mxu0 0.0
      %554 = vmatpush.msra.mxu0 0.0
      %555 = vmatpush.msra.mxu0 0.0
      %556 = vmatpush.msra.mxu0 0.0
      %557 = vmatpush.msra.mxu0 0.0
      %558 = vmatpush.msra.mxu0 0.0
      %559 = vmatpush.msra.mxu0 0.0
      %560 = vmatpush.msra.mxu0 0.0
      %561 = vmatpush.msra.mxu0 0.0
      %562 = vmatpush.msra.mxu0 0.0
      %563 = vmatpush.msra.mxu0 %v525
      %564 = vmatpush.msra.mxu0 %v521
      %565 = vmatpush.msra.mxu0 %v517
      %566 = vmatpush.msra.mxu0 %v513
      %567 = vmatmul.f32.gmra.mxu0 %v529
      %v568 = vpop.f32.mrf.mxu0
      %v569 = vadd.f32 0.0, %v568
      %570 = vdwg.mxu0
      %571 = vmatpush.msra.mxu0 0.0
      %572 = vmatpush.msra.mxu0 0.0
      %573 = vmatpush.msra.mxu0 0.0
      %574 = vmatpush.msra.mxu0 0.0
      %575 = vmatpush.msra.mxu0 0.0
      %576 = vmatpush.msra.mxu0 0.0
      %577 = vmatpush.msra.mxu0 0.0
      %578 = vmatpush.msra.mxu0 0.0
      %579 = vmatpush.msra.mxu0 0.0
      %580 = vmatpush.msra.mxu0 0.0
      %581 = vmatpush.msra.mxu0 0.0
      %582 = vmatpush.msra.mxu0 0.0
      %583 = vmatpush.msra.mxu0 %v526
      %584 = vmatpush.msra.mxu0 %v522
      %585 = vmatpush.msra.mxu0 %v518
      %586 = vmatpush.msra.mxu0 %v514
      %587 = vmatmul.f32.gmra.mxu0 %v529
      %v588 = vpop.f32.mrf.mxu0
      %v589 = vadd.f32 0.0, %v588
      %590 = vdwg.mxu0
      %591 = vmatpush.msra.mxu0 0.0
      %592 = vmatpush.msra.mxu0 0.0
      %593 = vmatpush.msra.mxu0 0.0
      %594 = vmatpush.msra.mxu0 0.0
      %595 = vmatpush.msra.mxu0 0.0
      %596 = vmatpush.msra.mxu0 0.0
      %597 = vmatpush.msra.mxu0 0.0
      %598 = vmatpush.msra.mxu0 0.0
      %599 = vmatpush.msra.mxu0 0.0
      %600 = vmatpush.msra.mxu0 0.0
      %601 = vmatpush.msra.mxu0 0.0
      %602 = vmatpush.msra.mxu0 0.0
      %603 = vmatpush.msra.mxu0 %v527
      %604 = vmatpush.msra.mxu0 %v523
      %605 = vmatpush.msra.mxu0 %v519
      %606 = vmatpush.msra.mxu0 %v515
      %607 = vmatmul.f32.gmra.mxu0 %v529
      %v608 = vpop.f32.mrf.mxu0
      %v609 = vadd.f32 0.0, %v608
      %610 = vdwg.mxu0
      %v611 = vmul.f32 %v279, %v549
      %v612 = vmul.f32 %v280, %v569
      %v613 = vmul.f32 %v281, %v589
      %v614 = vmul.f32 %v282, %v609
      %615 = vst [vmem:[%s278] sm:$0xff] %v611
      %616 = vst [vmem:[%s278 + $0x8] sm:$0xff] %v612
      %617 = vst [vmem:[%s278 + $0x10] sm:$0xff] %v613
      %618 = vst [vmem:[%s278 + $0x18] sm:$0xff] %v614
      %p619 = scmp.lt.s32.totalorder %s18, 1
      %s620 = scalar_select %p619, %s18, 1
      %s621 = smul.addr %s620, 4
      %s622 = smul.addr %s621, 8
      %s623 = scalar_lea.vmem %s7, %s622
      // Predicated region
      $region49: #{se_layer_1d.1} parent=47 // pred_check
        %p624 = pneg %p188
      $region50: #{se_layer_1d.1} parent=47 // pred_check_branch
        %626 = sbr.rel (%p624) target = $region52
      $region51: #{se_layer_1d.1} parent=47 // pred_region
        _
      $region52: #{se_layer_1d.1} parent=47 // pred_fallthru
        _
    $region48: #{se_layer_1d.1} parent=5 // pred_fallthru
      _
    %p627 = scmp.le.s32.totalorder 2, %s13
    // Predicated region
    $region53: #{se_layer_1d.1} parent=5 // pred_check
      %p628 = pneg %p627
    $region54: #{se_layer_1d.1} parent=5 // pred_check_branch
      %630 = sbr.rel (%p628) target = $region56
    $region55: #{se_layer_1d.1} parent=5 // pred_region
      %s631 = ssub.s32 %s13, 2
      // Predicated region
      $region57: #{se_layer_1d.1} parent=55 // pred_check
        %p632 = pneg %p194
      $region58: #{se_layer_1d.1} parent=55 // pred_check_branch
        %634 = sbr.rel (%p632) target = $region60
      $region59: #{se_layer_1d.1} parent=55 // pred_region
        %p635 = scmp.lt.s32.totalorder %s19, 1
        %s636 = scalar_select %p635, %s19, 1
        %s637 = smul.addr %s636, 4
        %s638 = smul.addr %s637, 8
        %s639 = scalar_lea.vmem %s7, %s638
      $region60: #{se_layer_1d.1} parent=55 // pred_fallthru
        _
    $region56: #{se_layer_1d.1} parent=5 // pred_fallthru
      _
  $region6: #{se_layer_1d.1} parent=0 // loop_footer
    %s17 = sadd.s32 1, %s13
  $region7: #{se_layer_1d.1} parent=0 // loop_footer_branch
    %12 = sbr.rel target = $region3
  $region8: #{se_layer_1d.1} parent=0 // loop_exit
    _

</llo_original>
